<compile_context>
chip_gen: v6e
topology: v6e:2x2x1
jax: 0.10.0
libtpu: 0.0.40
codegen_flags: <defaults>
</compile_context>

<pallas_src>
import functools
import math

import jax
import jax.numpy as jnp
from jax.experimental import pallas as pl
from jax.experimental.pallas import tpu as pltpu

_LANES = 128      # lane width (vreg minor dim)
_TM_MAX = 1024    # max rows per block (512 KiB f32 / block / input)
_CORES = 2        # leading "parallel" grid axis (2 TensorCores on v7x)


def _dice_partial_kernel(pr_ref, gt_ref, out_ref,
                         acc_tp_ref, acc_pr_ref, acc_gt_ref, *,
                         activation, threshold, total, pad, nblk, tm):
    """Accumulates per-core partials of [sum(gt*pr), sum(pr), sum(gt)].

    Hot loop is element-wise only (VPU); sublane folding to (8,128) happens once
    per core in the finalize branch and is written to a tiny per-core output.
    """
    core = pl.program_id(0)
    i = pl.program_id(1)

    @pl.when(i == 0)
    def _init():
        acc_tp_ref[...] = jnp.zeros_like(acc_tp_ref)
        acc_pr_ref[...] = jnp.zeros_like(acc_pr_ref)
        acc_gt_ref[...] = jnp.zeros_like(acc_gt_ref)

    pr = pr_ref[...].astype(jnp.float32)
    gt = gt_ref[...].astype(jnp.float32)

    thresholded = False
    if activation == 'sigmoid':
        if threshold is not None and 0.0 < float(threshold) < 1.0:
            # sigmoid is monotone: sigmoid(x) > t  <=>  x > logit(t).
            logit_t = math.log(float(threshold) / (1.0 - float(threshold)))
            pr = (pr > logit_t).astype(jnp.float32)
            thresholded = True
        else:
            pr = jax.nn.sigmoid(pr)
    elif activation is None or activation == 'none':
        pass
    else:
        # TODO(synk): softmax2d activation (per-pixel channel softmax) not implemented in-kernel.
        raise NotImplementedError(
            'Activation implemented for sigmoid and none in the Pallas kernel')

    if threshold is not None and not thresholded:
        pr = (pr > float(threshold)).astype(jnp.float32)

    if pad:
        # Zero-padded tail: gt padding is already 0 (tp / sum(gt) unaffected),
        # but pr padding would inflate sum(pr) (e.g. sigmoid(0)=0.5) -> mask it.
        # (int32 linear index: fine for any realistic N*C*H*W.)
        row0 = (core * nblk + i) * tm
        rix = jax.lax.broadcasted_iota(jnp.int32, (tm, _LANES), 0)
        cix = jax.lax.broadcasted_iota(jnp.int32, (tm, _LANES), 1)
        lin = (row0 + rix) * _LANES + cix
        pr = jnp.where(lin < total, pr, 0.0)

    # Pure element-wise accumulation (no cross-lane work in the hot loop).
    acc_tp_ref[...] += gt * pr
    acc_pr_ref[...] += pr
    acc_gt_ref[...] += gt

    @pl.when(i == pl.num_programs(1) - 1)
    def _finalize():
        # Fold (tm,128) -> (8,128) with vreg-granular adds; final reduce to
        # scalars (+ F-score formula) happens on a 12 KiB array in the wrapper.
        out_ref[0, 0] = acc_tp_ref[...].reshape(tm // 8, 8, _LANES).sum(axis=0)
        out_ref[0, 1] = acc_pr_ref[...].reshape(tm // 8, 8, _LANES).sum(axis=0)
        out_ref[0, 2] = acc_gt_ref[...].reshape(tm // 8, 8, _LANES).sum(axis=0)


def _nearest_resize_nchw(x, out_h, out_w):
    """Matches torch.nn.functional.interpolate(..., mode='nearest') (default)."""
    _, _, h, w = x.shape
    if (h, w) == (out_h, out_w):
        return x
    hi = (jnp.arange(out_h) * h) // out_h
    wi = (jnp.arange(out_w) * w) // out_w
    return x[:, :, hi[:, None], wi[None, :]]


def f_score(pr, gt, beta=1.0, eps=1e-07, threshold=None, activation='sigmoid'):
    """Pallas-backed equivalent of DiceLoss.f_score (returns the score scalar)."""
    n, c, hg, wg = gt.shape
    # Nearest-neighbor resize commutes with the elementwise activation/threshold,
    # so it is safe to gather the raw logits here and activate inside the kernel.
    pr = _nearest_resize_nchw(pr, hg, wg)

    total = int(n * c * hg * wg)
    rows = pl.cdiv(total, _LANES)

    # Adaptive block height: big enough to amortize grid-step overhead, small
    # enough to avoid useless padding on tiny inputs.  Multiple of 8 sublanes.
    tm = min(_TM_MAX, ((pl.cdiv(rows, _CORES) + 7) // 8) * 8)
    nblk = pl.cdiv(rows, _CORES * tm)
    padded_rows = _CORES * nblk * tm
    pad = padded_rows * _LANES - total

    pr_flat = pr.reshape(-1)           # native dtype; cast happens in-kernel
    gt_flat = gt.reshape(-1)
    if pad:
        pr_flat = jnp.pad(pr_flat, (0, pad))
        gt_flat = jnp.pad(gt_flat, (0, pad))
    pr2 = pr_flat.reshape(padded_rows, _LANES)
    gt2 = gt_flat.reshape(padded_rows, _LANES)

    kernel = functools.partial(
        _dice_partial_kernel,
        activation=activation,
        threshold=threshold,
        total=total,
        pad=int(pad),
        nblk=int(nblk),
        tm=int(tm),
    )

    in_spec = pl.BlockSpec((tm, _LANES), lambda core, i: (core * nblk + i, 0))

    partials = pl.pallas_call(
        kernel,
        out_shape=jax.ShapeDtypeStruct((_CORES, 3, 8, _LANES), jnp.float32),
        grid_spec=pltpu.PrefetchScalarGridSpec(
            num_scalar_prefetch=0,
            grid=(_CORES, nblk),
            in_specs=[in_spec, in_spec],
            out_specs=pl.BlockSpec((1, 3, 8, _LANES),
                                   lambda core, i: (core, 0, 0, 0)),
            scratch_shapes=[pltpu.VMEM((tm, _LANES), jnp.float32),
                            pltpu.VMEM((tm, _LANES), jnp.float32),
                            pltpu.VMEM((tm, _LANES), jnp.float32)],
        ),
        compiler_params=pltpu.CompilerParams(
            dimension_semantics=("parallel", "arbitrary")),
    )(pr2, gt2)

    sums = jnp.sum(partials, axis=(0, 2, 3))  # [tp, sum(pr), sum(gt)]
    tp, spr, sgt = sums[0], sums[1], sums[2]
    fp = spr - tp
    fn = sgt - tp
    b2 = float(beta) * float(beta)
    score = ((1.0 + b2) * tp + eps) / ((1.0 + b2) * tp + b2 * fn + fp + eps)
    return score


class DiceLoss:
    """JAX/Pallas port of the PyTorch DiceLoss module (forward pass only)."""

    def __init__(self, beta=1, eps=1e-07, threshold=None, activation='sigmoid'):
        self.beta = beta
        self.eps = eps
        self.threshold = threshold
        self.activation = activation

    def __call__(self, outputs, annotation):
        loss = 0.0
        if isinstance(outputs, list):
            for output in outputs:
                loss += 1.0 - f_score(output, annotation, self.beta, self.eps,
                                      self.threshold, self.activation)
        else:
            loss += 1.0 - f_score(outputs, annotation, self.beta, self.eps,
                                  self.threshold, self.activation)
        return loss


def _ref_f_score(pr, gt, beta=1.0, eps=1e-07, threshold=None, activation='sigmoid'):
    """Pure-JAX reference mirroring the PyTorch f_score op-for-op."""
    if activation == 'sigmoid':
        pr = jax.nn.sigmoid(pr)
    if threshold is not None:
        pr = (pr > threshold).astype(jnp.float32)
    pr = _nearest_resize_nchw(pr, gt.shape[2], gt.shape[3])
    tp = jnp.sum(gt * pr)
    fp = jnp.sum(pr) - tp
    fn = jnp.sum(gt) - tp
    b2 = beta * beta
    return ((1.0 + b2) * tp + eps) / ((1.0 + b2) * tp + b2 * fn + fp + eps)


if __name__ == "__main__":
    key = jax.random.PRNGKey(0)
    k1, k2, k3 = jax.random.split(key, 3)

    # NCHW predictions (logits) and a binary annotation mask.
    outputs = jax.random.normal(k1, (2, 4, 16, 16), dtype=jnp.float32)
    annotation = (jax.random.uniform(k2, (2, 4, 16, 16)) > 0.5).astype(jnp.float32)

    loss_mod = DiceLoss()  # beta=1, eps=1e-7, threshold=None, activation='sigmoid'

    # Single-tensor path.
    loss = loss_mod(outputs, annotation)
    jax.block_until_ready(loss)
    ref = 1.0 - _ref_f_score(outputs, annotation)
    assert jnp.allclose(loss, ref, atol=1e-4, rtol=1e-4), (loss, ref)

    # List-of-outputs path, including one output at a different spatial size
    # (exercises the nearest-neighbor interpolate to gt's H/W).
    outputs_small = jax.random.normal(k3, (2, 4, 8, 8), dtype=jnp.float32)
    loss_list = loss_mod([outputs, outputs_small], annotation)
    jax.block_until_ready(loss_list)
    ref_list = ((1.0 - _ref_f_score(outputs, annotation)) +
                (1.0 - _ref_f_score(outputs_small, annotation)))
    assert jnp.allclose(loss_list, ref_list, atol=1e-4, rtol=1e-4), (loss_list, ref_list)

    # Threshold path (exercises the logit-threshold shortcut).
    loss_thr = DiceLoss(threshold=0.5)(outputs, annotation)
    jax.block_until_ready(loss_thr)

    print("KERNEL_OK")
</pallas_src>

<mosaic_0001>
module attributes {stable_mosaic.version = 11 : i64} {
  func.func @_dice_partial_kernel(%arg0: i32, %arg1: i32, %arg2: memref<8x128xf32, #tpu.memory_space<vmem>>, %arg3: memref<8x128xf32, #tpu.memory_space<vmem>>, %arg4: memref<1x3x8x128xf32, #tpu.memory_space<vmem>>, %arg5: memref<8x128xf32, #tpu.memory_space<vmem>>, %arg6: memref<8x128xf32, #tpu.memory_space<vmem>>, %arg7: memref<8x128xf32, #tpu.memory_space<vmem>>) attributes {dimension_semantics = [#tpu.dimension_semantics<parallel>, #tpu.dimension_semantics<arbitrary>], iteration_bounds = array<i64: 2, 1>, scalar_prefetch = 0 : i64, scratch_operands = 3 : i64, tpu.core_type = #tpu.core_type<tc>, window_params = [{transform_indices = @transform_0, window_bounds = array<i64: 8, 128>}, {transform_indices = @transform_1, window_bounds = array<i64: 8, 128>}, {transform_indices = @transform_2, window_bounds = array<i64: 1, 3, 8, 128>}]} {
    %c0_i32 = arith.constant 0 : i32
    %0 = arith.cmpi eq, %arg1, %c0_i32 : i32
    %1 = arith.extui %0 : i1 to i32
    %c0_i32_0 = arith.constant 0 : i32
    %2 = arith.cmpi ne, %1, %c0_i32_0 : i32
    scf.if %2 {
      %cst_18 = arith.constant 0.000000e+00 : f32
      %23 = vector.broadcast %cst_18 : f32 to vector<8x128xf32>
      %c0_19 = arith.constant 0 : index
      %c0_20 = arith.constant 0 : index
      %24 = vector.load %arg5[%c0_19, %c0_20] : memref<8x128xf32, #tpu.memory_space<vmem>>, vector<8x128xf32>
      tpu.vector_store %arg5[%c0_19, %c0_20], %23 {strides = array<i32>} : memref<8x128xf32, #tpu.memory_space<vmem>>, vector<8x128xf32>,
      %cst_21 = arith.constant 0.000000e+00 : f32
      %25 = vector.broadcast %cst_21 : f32 to vector<8x128xf32>
      %c0_22 = arith.constant 0 : index
      %c0_23 = arith.constant 0 : index
      %26 = vector.load %arg6[%c0_22, %c0_23] : memref<8x128xf32, #tpu.memory_space<vmem>>, vector<8x128xf32>
      tpu.vector_store %arg6[%c0_22, %c0_23], %25 {strides = array<i32>} : memref<8x128xf32, #tpu.memory_space<vmem>>, vector<8x128xf32>,
      %cst_24 = arith.constant 0.000000e+00 : f32
      %27 = vector.broadcast %cst_24 : f32 to vector<8x128xf32>
      %c0_25 = arith.constant 0 : index
      %c0_26 = arith.constant 0 : index
      %28 = vector.load %arg7[%c0_25, %c0_26] : memref<8x128xf32, #tpu.memory_space<vmem>>, vector<8x128xf32>
      tpu.vector_store %arg7[%c0_25, %c0_26], %27 {strides = array<i32>} : memref<8x128xf32, #tpu.memory_space<vmem>>, vector<8x128xf32>,
    } else {
    }
    %c0 = arith.constant 0 : index
    %c0_1 = arith.constant 0 : index
    %3 = vector.load %arg2[%c0, %c0_1] : memref<8x128xf32, #tpu.memory_space<vmem>>, vector<8x128xf32>
    %c0_2 = arith.constant 0 : index
    %c0_3 = arith.constant 0 : index
    %4 = vector.load %arg3[%c0_2, %c0_3] : memref<8x128xf32, #tpu.memory_space<vmem>>, vector<8x128xf32>
    %5 = arith.negf %3 : vector<8x128xf32>
    %6 = math.exp %5 : vector<8x128xf32>
    %cst = arith.constant 1.000000e+00 : f32
    %7 = vector.broadcast %cst : f32 to vector<8x128xf32>
    %8 = arith.addf %7, %6 : vector<8x128xf32>
    %9 = arith.divf %7, %8 : vector<8x128xf32>
    %c0_4 = arith.constant 0 : index
    %c0_5 = arith.constant 0 : index
    %10 = vector.load %arg5[%c0_4, %c0_5] : memref<8x128xf32, #tpu.memory_space<vmem>>, vector<8x128xf32>
    %11 = arith.mulf %4, %9 : vector<8x128xf32>
    %12 = arith.addf %10, %11 : vector<8x128xf32>
    %c0_6 = arith.constant 0 : index
    %c0_7 = arith.constant 0 : index
    %13 = vector.load %arg5[%c0_6, %c0_7] : memref<8x128xf32, #tpu.memory_space<vmem>>, vector<8x128xf32>
    tpu.vector_store %arg5[%c0_6, %c0_7], %12 {strides = array<i32>} : memref<8x128xf32, #tpu.memory_space<vmem>>, vector<8x128xf32>,
    %c0_8 = arith.constant 0 : index
    %c0_9 = arith.constant 0 : index
    %14 = vector.load %arg6[%c0_8, %c0_9] : memref<8x128xf32, #tpu.memory_space<vmem>>, vector<8x128xf32>
    %15 = arith.addf %14, %9 : vector<8x128xf32>
    %c0_10 = arith.constant 0 : index
    %c0_11 = arith.constant 0 : index
    %16 = vector.load %arg6[%c0_10, %c0_11] : memref<8x128xf32, #tpu.memory_space<vmem>>, vector<8x128xf32>
    tpu.vector_store %arg6[%c0_10, %c0_11], %15 {strides = array<i32>} : memref<8x128xf32, #tpu.memory_space<vmem>>, vector<8x128xf32>,
    %c0_12 = arith.constant 0 : index
    %c0_13 = arith.constant 0 : index
    %17 = vector.load %arg7[%c0_12, %c0_13] : memref<8x128xf32, #tpu.memory_space<vmem>>, vector<8x128xf32>
    %18 = arith.addf %17, %4 : vector<8x128xf32>
    %c0_14 = arith.constant 0 : index
    %c0_15 = arith.constant 0 : index
    %19 = vector.load %arg7[%c0_14, %c0_15] : memref<8x128xf32, #tpu.memory_space<vmem>>, vector<8x128xf32>
    tpu.vector_store %arg7[%c0_14, %c0_15], %18 {strides = array<i32>} : memref<8x128xf32, #tpu.memory_space<vmem>>, vector<8x128xf32>,
    %c0_i32_16 = arith.constant 0 : i32
    %20 = arith.cmpi eq, %arg1, %c0_i32_16 : i32
    %21 = arith.extui %20 : i1 to i32
    %c0_i32_17 = arith.constant 0 : i32
    %22 = arith.cmpi ne, %21, %c0_i32_17 : i32
    scf.if %22 {
      %c0_18 = arith.constant 0 : index
      %c0_19 = arith.constant 0 : index
      %23 = vector.load %arg5[%c0_18, %c0_19] : memref<8x128xf32, #tpu.memory_space<vmem>>, vector<8x128xf32>
      %24 = vector.shape_cast %23 : vector<8x128xf32> to vector<1x8x128xf32>
      %cst_20 = arith.constant dense<0.000000e+00> : vector<8x128xf32>
      %25 = vector.multi_reduction <add>, %24, %cst_20 [0] : vector<1x8x128xf32> to vector<8x128xf32>
      %c0_21 = arith.constant 0 : index
      %c0_22 = arith.constant 0 : index
      %c0_23 = arith.constant 0 : index
      %c0_24 = arith.constant 0 : index
      %26 = vector.load %arg4[%c0_21, %c0_22, %c0_23, %c0_24] : memref<1x3x8x128xf32, #tpu.memory_space<vmem>>, vector<1x1x8x128xf32>
      %27 = vector.shape_cast %26 : vector<1x1x8x128xf32> to vector<8x128xf32>
      %28 = vector.shape_cast %25 : vector<8x128xf32> to vector<1x1x8x128xf32>
      tpu.vector_store %arg4[%c0_21, %c0_22, %c0_23, %c0_24], %28 {strides = array<i32>} : memref<1x3x8x128xf32, #tpu.memory_space<vmem>>, vector<1x1x8x128xf32>,
      %c0_25 = arith.constant 0 : index
      %c0_26 = arith.constant 0 : index
      %29 = vector.load %arg6[%c0_25, %c0_26] : memref<8x128xf32, #tpu.memory_space<vmem>>, vector<8x128xf32>
      %30 = vector.shape_cast %29 : vector<8x128xf32> to vector<1x8x128xf32>
      %cst_27 = arith.constant dense<0.000000e+00> : vector<8x128xf32>
      %31 = vector.multi_reduction <add>, %30, %cst_27 [0] : vector<1x8x128xf32> to vector<8x128xf32>
      %c0_28 = arith.constant 0 : index
      %c1 = arith.constant 1 : index
      %c0_29 = arith.constant 0 : index
      %c0_30 = arith.constant 0 : index
      %32 = vector.load %arg4[%c0_28, %c1, %c0_29, %c0_30] : memref<1x3x8x128xf32, #tpu.memory_space<vmem>>, vector<1x1x8x128xf32>
      %33 = vector.shape_cast %32 : vector<1x1x8x128xf32> to vector<8x128xf32>
      %34 = vector.shape_cast %31 : vector<8x128xf32> to vector<1x1x8x128xf32>
      tpu.vector_store %arg4[%c0_28, %c1, %c0_29, %c0_30], %34 {strides = array<i32>} : memref<1x3x8x128xf32, #tpu.memory_space<vmem>>, vector<1x1x8x128xf32>,
      %c0_31 = arith.constant 0 : index
      %c0_32 = arith.constant 0 : index
      %35 = vector.load %arg7[%c0_31, %c0_32] : memref<8x128xf32, #tpu.memory_space<vmem>>, vector<8x128xf32>
      %36 = vector.shape_cast %35 : vector<8x128xf32> to vector<1x8x128xf32>
      %cst_33 = arith.constant dense<0.000000e+00> : vector<8x128xf32>
      %37 = vector.multi_reduction <add>, %36, %cst_33 [0] : vector<1x8x128xf32> to vector<8x128xf32>
      %c0_34 = arith.constant 0 : index
      %c2 = arith.constant 2 : index
      %c0_35 = arith.constant 0 : index
      %c0_36 = arith.constant 0 : index
      %38 = vector.load %arg4[%c0_34, %c2, %c0_35, %c0_36] : memref<1x3x8x128xf32, #tpu.memory_space<vmem>>, vector<1x1x8x128xf32>
      %39 = vector.shape_cast %38 : vector<1x1x8x128xf32> to vector<8x128xf32>
      %40 = vector.shape_cast %37 : vector<8x128xf32> to vector<1x1x8x128xf32>
      tpu.vector_store %arg4[%c0_34, %c2, %c0_35, %c0_36], %40 {strides = array<i32>} : memref<1x3x8x128xf32, #tpu.memory_space<vmem>>, vector<1x1x8x128xf32>,
    } else {
    }
    return
  }
  func.func @transform_0(%arg0: i32, %arg1: i32) -> (i32, i32) {
    %c1_i32 = arith.constant 1 : i32
    %0 = arith.muli %arg0, %c1_i32 : i32
    %1 = arith.addi %0, %arg1 : i32
    %c0_i32 = arith.constant 0 : i32
    %c0_i32_0 = arith.constant 0 : i32
    return %1, %c0_i32 : i32, i32
  }
  func.func @transform_1(%arg0: i32, %arg1: i32) -> (i32, i32) {
    %c1_i32 = arith.constant 1 : i32
    %0 = arith.muli %arg0, %c1_i32 : i32
    %1 = arith.addi %0, %arg1 : i32
    %c0_i32 = arith.constant 0 : i32
    %c0_i32_0 = arith.constant 0 : i32
    return %1, %c0_i32 : i32, i32
  }
  func.func @transform_2(%arg0: i32, %arg1: i32) -> (i32, i32, i32, i32) {
    %c0_i32 = arith.constant 0 : i32
    %c0_i32_0 = arith.constant 0 : i32
    %c0_i32_1 = arith.constant 0 : i32
    %c0_i32_2 = arith.constant 0 : i32
    return %arg0, %c0_i32, %c0_i32_0, %c0_i32_1 : i32, i32, i32, i32
  }
}

</mosaic_0001>

<llo_original>
// kernel: tpu_custom_call.1
$region0: #{tpu_custom_call.1}
  #allocation0 [shape = 'u32[]', space=smem, size = 0x4, offset = 0x4, fixed_abs, tag = 'smem constant byte address 0x4 - core index']
  #allocation1 [shape = 'u32[144,128]{1,0:T(1,128)}', space=vmem, size = 0x12000, scoped, tag = 'internal scratch']
  #allocation2 [shape = 'f32[8,128]{1,0:T(8,128)}', space=vmem, size = 0x1000, scoped, tag = 'scratch operand']
  #allocation3 [shape = 'f32[8,128]{1,0:T(8,128)}', space=vmem, size = 0x1000, scoped, tag = 'scratch operand']
  #allocation4 [shape = 'f32[8,128]{1,0:T(8,128)}', space=vmem, size = 0x1000, scoped, tag = 'scratch operand']
  %s0 = inlined_call_operand.hbm [shape: f32[16,128], index: 0, kind: input, shape index: {}]
  %s1 = inlined_call_operand.hbm [shape: f32[16,128], index: 1, kind: input, shape index: {}]
  %s2 = inlined_call_operand.hbm [shape: f32[2,3,8,128], index: 2, kind: output, shape index: {}]
  %s3 = sld [smem:[#allocation0]]
  $region57: #{tpu_custom_call.1} parent=0
    _
  %s5 = ssub.s32 1, %s3
  %s6 = scalar_select 0, %s5, %s3
  $region1: #{tpu_custom_call.1} parent=0
    #allocation5 [shape = 'u8[8192]{0}', space=vmem, size = 0x2000, scoped, tag = 'input window, operand 0']
    #allocation6 [shape = 's32[2]{0}', space=sflag, size = 0x8, scoped, tag = 'scoped memory for tpu_custom_call.1']
    #allocation7 [shape = 's32[2]{0}', space=sflag, size = 0x8, scoped, tag = 'scoped memory for tpu_custom_call.1']
    #allocation8 [shape = 'u8[8192]{0}', space=vmem, size = 0x2000, scoped, tag = 'input window, operand 1']
    #allocation9 [shape = 's32[2]{0}', space=sflag, size = 0x8, scoped, tag = 'scoped memory for tpu_custom_call.1']
    #allocation10 [shape = 'u8[24576]{0}', space=vmem, size = 0x6000, scoped, tag = 'output window, operand 0']
    %7 = vsyncpa [#allocation6], 0
    %s8 = scalar_lea.sflag [#allocation6], 1
    %9 = vsyncpa %s8, 0
    %10 = vsyncpa [#allocation9], 0
    %s11 = scalar_lea.sflag [#allocation9], 1
    %12 = vsyncpa %s11, 0
    %13 = vsyncpa [#allocation7], 0
    %s14 = scalar_lea.sflag [#allocation7], 1
    %15 = vsyncpa %s14, 0
    loop: start=0, step=1, limit=4
    $region2: #{tpu_custom_call.1} parent=1 // loop_pre_header
      _
    $region3: #{tpu_custom_call.1} parent=1 // loop_header
      %s17 = sphi 0, %s21
      %p18 = scmp.ge.s32.totalorder %s17, 4
      %s24 = sphi 0, %s36
      %s25 = sphi 0, %s32
      %s26 = sphi 0, %s24
      %s27 = sphi 0, %s25
      %s28 = sphi 0, %s26
      %s29 = sphi 0, %s27
      %s41 = sphi 0, %s43
      %s44 = sphi 0, %s41
      %s45 = sphi 0, %s44
      %s61 = sphi 0, %s45
      %s69 = sphi 0, %s71
      %s72 = sphi 0, %s69
      %s73 = sphi 0, %s72
      %s89 = sphi 0, %s73
      %s95 = sphi 0, %s97
      %s98 = sphi 0, %s95
      %s99 = sphi 0, %s98
      %s115 = sphi 0, %s99
    $region4: #{tpu_custom_call.1} parent=1 // loop_header_branch
      %20 = sbr.rel (%p18) target = $region8
    $region5: #{tpu_custom_call.1} parent=1 // loop_body
      %s22 = ssub.s32 %s17, 1
      %s23 = ssub.s32 %s17, 2
      %s30 = sadd.s32 1, %s25
      %p31 = scmp.ge.s32.totalorder %s30, 1
      %s32 = scalar_select %p31, 0, %s30
      %s33 = sadd.s32 1, %s24
      %s34 = scalar_select %p31, %s33, %s24
      %p35 = scmp.ge.s32.totalorder %s34, 2
      %s36 = scalar_select %p35, 0, %s34
      %s37 = sadd.s32 %s24, %s25
      %s38 = sadd.s32 %s36, %s32
      %s39 = ssub.s32 %s37, %s38
      %p40 = scmp.eq.s32.totalorder %s39, 0
      %s42 = sadd.s32 %s41, 1
      %s43 = scalar_select %p40, %s41, %s42
      %p46 = pneg %p40
      %p47 = scmp.eq.s32.totalorder %s17, 1
      %p48 = por %p46, %p47
      %p49 = scmp.ne.s32.totalorder %s41, %s44
      %p50 = scmp.eq.s32.totalorder %s17, 0
      %p51 = por %p49, %p50
      %p52 = scmp.ne.s32.totalorder %s41, %s44
      %p53 = scmp.eq.s32.totalorder %s22, 1
      %p54 = por %p52, %p53
      %p55 = scmp.ne.s32.totalorder %s44, %s45
      %p56 = scmp.eq.s32.totalorder %s22, 0
      %p57 = por %p55, %p56
      %p58 = scmp.ne.s32.totalorder %s44, %s45
      %p59 = scmp.eq.s32.totalorder %s23, 1
      %p60 = por %p58, %p59
      %p62 = scmp.ne.s32.totalorder %s45, %s61
      %p63 = scmp.eq.s32.totalorder %s23, 0
      %p64 = por %p62, %p63
      %s65 = sadd.s32 %s24, %s25
      %s66 = sadd.s32 %s36, %s32
      %s67 = ssub.s32 %s65, %s66
      %p68 = scmp.eq.s32.totalorder %s67, 0
      %s70 = sadd.s32 %s69, 1
      %s71 = scalar_select %p68, %s69, %s70
      %p74 = pneg %p68
      %p75 = scmp.eq.s32.totalorder %s17, 1
      %p76 = por %p74, %p75
      %p77 = scmp.ne.s32.totalorder %s69, %s72
      %p78 = scmp.eq.s32.totalorder %s17, 0
      %p79 = por %p77, %p78
      %p80 = scmp.ne.s32.totalorder %s69, %s72
      %p81 = scmp.eq.s32.totalorder %s22, 1
      %p82 = por %p80, %p81
      %p83 = scmp.ne.s32.totalorder %s72, %s73
      %p84 = scmp.eq.s32.totalorder %s22, 0
      %p85 = por %p83, %p84
      %p86 = scmp.ne.s32.totalorder %s72, %s73
      %p87 = scmp.eq.s32.totalorder %s23, 1
      %p88 = por %p86, %p87
      %p90 = scmp.ne.s32.totalorder %s73, %s89
      %p91 = scmp.eq.s32.totalorder %s23, 0
      %p92 = por %p90, %p91
      %s93 = ssub.s32 %s24, %s36
      %p94 = scmp.eq.s32.totalorder %s93, 0
      %s96 = sadd.s32 %s95, 1
      %s97 = scalar_select %p94, %s95, %s96
      %p100 = pneg %p94
      %p101 = scmp.eq.s32.totalorder %s17, 1
      %p102 = por %p100, %p101
      %p103 = scmp.ne.s32.totalorder %s95, %s98
      %p104 = scmp.eq.s32.totalorder %s17, 0
      %p105 = por %p103, %p104
      %p106 = scmp.ne.s32.totalorder %s95, %s98
      %p107 = scmp.eq.s32.totalorder %s22, 1
      %p108 = por %p106, %p107
      %p109 = scmp.ne.s32.totalorder %s98, %s99
      %p110 = scmp.eq.s32.totalorder %s22, 0
      %p111 = por %p109, %p110
      %p112 = scmp.ne.s32.totalorder %s98, %s99
      %p113 = scmp.eq.s32.totalorder %s23, 1
      %p114 = por %p112, %p113
      %p116 = scmp.ne.s32.totalorder %s99, %s115
      %p117 = scmp.eq.s32.totalorder %s23, 0
      %p118 = por %p116, %p117
      %p119 = scmp.le.s32.totalorder 1, %s17
      %p120 = scmp.lt.s32.totalorder %s17, 3
      %p121 = pnand %p119, %p120
      %p122 = pneg %p121
      // Predicated region
      $region9: #{tpu_custom_call.1} parent=5 // pred_check
        _
      $region10: #{tpu_custom_call.1} parent=5 // pred_check_branch
        %124 = sbr.rel (%p121) target = $region12
      $region11: #{tpu_custom_call.1} parent=5 // pred_region
        %s125 = ssub.s32 %s17, 1
      $region12: #{tpu_custom_call.1} parent=5 // pred_fallthru
        _
      %p126 = scmp.lt.s32.totalorder %s17, 2
      // Predicated region
      $region13: #{tpu_custom_call.1} parent=5 // pred_check
        %p127 = pneg %p126
      $region14: #{tpu_custom_call.1} parent=5 // pred_check_branch
        %129 = sbr.rel (%p127) target = $region16
      $region15: #{tpu_custom_call.1} parent=5 // pred_region
        // Predicated region
        $region17: #{tpu_custom_call.1} parent=15 // pred_check
          %p130 = pneg %p51
        $region18: #{tpu_custom_call.1} parent=15 // pred_check_branch
          %132 = sbr.rel (%p130) target = $region20
        $region19: #{tpu_custom_call.1} parent=15 // pred_region
          %s133 = sand.u32 %s41, 1
          %s134 = scalar_lea.sflag [#allocation6], %s133
          %s135 = sand.u32 %s41, 1
          %s136 = smul.addr %s135, 8
          %s137 = scalar_lea.vmem [#allocation5], %s136
          %s138 = sadd.s32 %s24, %s25
          %s140 = ssub.s32 128, 128
          %141 = vsyncadd %s134, %s140
          %s142 = smul.addr %s138, 128
          %s143 = scalar_lea.hbm %s0, %s142
          %s145 = sshll.u32 %s137, 4
          %s146 = int_to_ptr.vmem [resolvable:$true] %s145
          %148 = dma.hbm_to_vmem [thread:$0]  %s143, 128, %s146, %s134
        $region20: #{tpu_custom_call.1} parent=15 // pred_fallthru
          _
        // Predicated region
        $region21: #{tpu_custom_call.1} parent=15 // pred_check
          %p149 = pneg %p79
        $region22: #{tpu_custom_call.1} parent=15 // pred_check_branch
          %151 = sbr.rel (%p149) target = $region24
        $region23: #{tpu_custom_call.1} parent=15 // pred_region
          %s152 = sand.u32 %s69, 1
          %s153 = scalar_lea.sflag [#allocation9], %s152
          %s154 = sand.u32 %s69, 1
          %s155 = smul.addr %s154, 8
          %s156 = scalar_lea.vmem [#allocation8], %s155
          %s157 = sadd.s32 %s24, %s25
          %s159 = ssub.s32 128, 128
          %160 = vsyncadd %s153, %s159
          %s161 = smul.addr %s157, 128
          %s162 = scalar_lea.hbm %s1, %s161
          %s164 = sshll.u32 %s156, 4
          %s165 = int_to_ptr.vmem [resolvable:$true] %s164
          %167 = dma.hbm_to_vmem [thread:$0]  %s162, 128, %s165, %s153
        $region24: #{tpu_custom_call.1} parent=15 // pred_fallthru
          _
      $region16: #{tpu_custom_call.1} parent=5 // pred_fallthru
        _
      %p168 = scmp.le.s32.totalorder 1, %s17
      %p169 = scmp.lt.s32.totalorder %s17, 3
      %p170 = pnand %p168, %p169
      %p171 = pneg %p170
      // Predicated region
      $region25: #{tpu_custom_call.1} parent=5 // pred_check
        _
      $region26: #{tpu_custom_call.1} parent=5 // pred_check_branch
        %173 = sbr.rel (%p170) target = $region28
      $region27: #{tpu_custom_call.1} parent=5 // pred_region
        %s174 = ssub.s32 %s17, 1
        %s175 = sand.u32 %s44, 1
        %s176 = scalar_lea.sflag [#allocation6], %s175
        %s177 = sand.u32 %s44, 1
        %s178 = smul.addr %s177, 8
        %s179 = scalar_lea.vmem [#allocation5], %s178
        // Predicated region
        $region29: #{tpu_custom_call.1} parent=27 // pred_check
          %p180 = pneg %p57
        $region30: #{tpu_custom_call.1} parent=27 // pred_check_branch
          %182 = sbr.rel (%p180) target = $region32
        $region31: #{tpu_custom_call.1} parent=27 // pred_region
          %183 = dma.done %s176, 128
        $region32: #{tpu_custom_call.1} parent=27 // pred_fallthru
          _
        %s184 = sand.u32 %s72, 1
        %s185 = scalar_lea.sflag [#allocation9], %s184
        %s186 = sand.u32 %s72, 1
        %s187 = smul.addr %s186, 8
        %s188 = scalar_lea.vmem [#allocation8], %s187
        // Predicated region
        $region33: #{tpu_custom_call.1} parent=27 // pred_check
          %p189 = pneg %p85
        $region34: #{tpu_custom_call.1} parent=27 // pred_check_branch
          %191 = sbr.rel (%p189) target = $region36
        $region35: #{tpu_custom_call.1} parent=27 // pred_region
          %192 = dma.done %s185, 128
        $region36: #{tpu_custom_call.1} parent=27 // pred_fallthru
          _
        %s193 = sand.u32 %s44, 1
        %s194 = scalar_lea.sflag [#allocation6], %s193
        %s195 = sand.u32 %s44, 1
        %s196 = smul.addr %s195, 8
        %s197 = scalar_lea.vmem [#allocation5], %s196
        %p198 = pneg %p57
        %p199 = pneg %p54
        %s200 = sand.u32 %s72, 1
        %s201 = scalar_lea.sflag [#allocation9], %s200
        %s202 = sand.u32 %s72, 1
        %s203 = smul.addr %s202, 8
        %s204 = scalar_lea.vmem [#allocation8], %s203
        %p205 = pneg %p85
        %p206 = pneg %p82
        %p207 = pneg %p111
        %p208 = pneg %p108
        %s209 = sand.u32 %s98, 1
        %s210 = scalar_lea.sflag [#allocation7], %s209
        %s211 = sand.u32 %s98, 1
        %s212 = smul.addr %s211, 24
        %s213 = scalar_lea.vmem [#allocation10], %s212
        %s214 = sadd.s32 %s26, %s27
        %s215 = sadd.s32 %s26, %s27
        %p216 = scmp.eq.s32.totalorder %s27, 0
        // Predicated region
        $region37: #{tpu_custom_call.1} parent=27 // pred_check
          %p217 = pneg %p216
        $region38: #{tpu_custom_call.1} parent=27 // pred_check_branch
          %219 = sbr.rel (%p217) target = $region40
        $region39: #{tpu_custom_call.1} parent=27 // pred_region
          %220 = vst [vmem:[#allocation2] sm:$0xff] 0.0
          %221 = vst [vmem:[#allocation3] sm:$0xff] 0.0
          %222 = vst [vmem:[#allocation4] sm:$0xff] 0.0
        $region40: #{tpu_custom_call.1} parent=27 // pred_fallthru
          _
        %v223 = vld [vmem:[%s179] sm:$0xff]
        %v224 = vld [vmem:[%s188] sm:$0xff]
        %v225 = vxor.u32 %v223, 2147483648
        %v226 = vmul.f32 %v225, 1.442695
        %v227 = vpow.pop %v226
        %v228 = vadd.f32 %v227, 1.0
        %v229 = vrcp.pop %v228
        %v230 = vmul.f32 1.0, %v229
        %v231 = vld [vmem:[#allocation2] sm:$0xff]
        %v232 = vmul.f32 %v224, %v230
        %v233 = vadd.f32 %v231, %v232
        %234 = vst [vmem:[#allocation2] sm:$0xff] %v233
        %v235 = vld [vmem:[#allocation3] sm:$0xff]
        %v236 = vadd.f32 %v235, %v230
        %237 = vst [vmem:[#allocation3] sm:$0xff] %v236
        %v238 = vld [vmem:[#allocation4] sm:$0xff]
        %v239 = vadd.f32 %v238, %v224
        %240 = vst [vmem:[#allocation4] sm:$0xff] %v239
        // Predicated region
        $region41: #{tpu_custom_call.1} parent=27 // pred_check
          %p241 = pneg %p216
        $region42: #{tpu_custom_call.1} parent=27 // pred_check_branch
          %243 = sbr.rel (%p241) target = $region44
        $region43: #{tpu_custom_call.1} parent=27 // pred_region
          %v244 = vld [vmem:[#allocation2] sm:$0xff]
          %v245 = vadd.f32 %v244, 0.0
          %246 = vst [vmem:[%s213] sm:$0xff] %v245
          %v247 = vld [vmem:[#allocation3] sm:$0xff]
          %v248 = vadd.f32 %v247, 0.0
          %s249 = scalar_lea.vmem %s213, 8 [#allocation10]
          %250 = vst [vmem:[%s249] sm:$0xff] %v248
          %v251 = vld [vmem:[#allocation4] sm:$0xff]
          %v252 = vadd.f32 %v251, 0.0
          %s253 = scalar_lea.vmem %s213, 16 [#allocation10]
          %254 = vst [vmem:[%s253] sm:$0xff] %v252
        $region44: #{tpu_custom_call.1} parent=27 // pred_fallthru
          _
        %s255 = sand.u32 %s98, 1
        %s256 = scalar_lea.sflag [#allocation7], %s255
        %s257 = sand.u32 %s98, 1
        %s258 = smul.addr %s257, 24
        %s259 = scalar_lea.vmem [#allocation10], %s258
        // Predicated region
        $region45: #{tpu_custom_call.1} parent=27 // pred_check
          %p260 = pneg %p108
        $region46: #{tpu_custom_call.1} parent=27 // pred_check_branch
          %262 = sbr.rel (%p260) target = $region48
        $region47: #{tpu_custom_call.1} parent=27 // pred_region
          %s264 = ssub.s32 384, 384
          %265 = vsyncadd %s256, %s264
          %s266 = smul.addr %s26, 3
          %s267 = smul.addr %s266, 128
          %s268 = scalar_lea.hbm %s2, %s267
          %s269 = sshll.u32 %s259, 4
          %s270 = int_to_ptr.vmem [resolvable:$true] %s269
          %275 = dma.vmem_to_hbm [thread:$0]  %s270, 384, %s268, %s256, 128, 128, 8
        $region48: #{tpu_custom_call.1} parent=27 // pred_fallthru
          _
      $region28: #{tpu_custom_call.1} parent=5 // pred_fallthru
        _
      %p276 = scmp.le.s32.totalorder 2, %s17
      // Predicated region
      $region49: #{tpu_custom_call.1} parent=5 // pred_check
        %p277 = pneg %p276
      $region50: #{tpu_custom_call.1} parent=5 // pred_check_branch
        %279 = sbr.rel (%p277) target = $region52
      $region51: #{tpu_custom_call.1} parent=5 // pred_region
        %s280 = ssub.s32 %s17, 2
        // Predicated region
        $region53: #{tpu_custom_call.1} parent=51 // pred_check
          %p281 = pneg %p114
        $region54: #{tpu_custom_call.1} parent=51 // pred_check_branch
          %283 = sbr.rel (%p281) target = $region56
        $region55: #{tpu_custom_call.1} parent=51 // pred_region
          %s284 = sand.u32 %s99, 1
          %s285 = scalar_lea.sflag [#allocation7], %s284
          %s286 = sand.u32 %s99, 1
          %s287 = smul.addr %s286, 24
          %s288 = scalar_lea.vmem [#allocation10], %s287
          %289 = dma.done %s285, 384
        $region56: #{tpu_custom_call.1} parent=51 // pred_fallthru
          _
      $region52: #{tpu_custom_call.1} parent=5 // pred_fallthru
        _
    $region6: #{tpu_custom_call.1} parent=1 // loop_footer
      %s21 = sadd.s32 1, %s17
    $region7: #{tpu_custom_call.1} parent=1 // loop_footer_branch
      %16 = sbr.rel target = $region3
    $region8: #{tpu_custom_call.1} parent=1 // loop_exit
      _
    %290 = vsyncpa [#allocation6], 1
    %s291 = scalar_lea.sflag [#allocation6], 1
    %292 = vsyncpa %s291, 1
    %293 = vsyncpa [#allocation9], 1
    %s294 = scalar_lea.sflag [#allocation9], 1
    %295 = vsyncpa %s294, 1
    %296 = vsyncpa [#allocation7], 1
    %s297 = scalar_lea.sflag [#allocation7], 1
    %298 = vsyncpa %s297, 1

</llo_original>
